<compile_context>
chip_gen: v5e
topology: v5e:2x2
jax: 0.10.0
libtpu: 0.0.40
codegen_flags: <defaults>
</compile_context>

<pallas_src>
import functools

import jax
import jax.numpy as jnp
import numpy as np
from jax import lax
from jax.experimental import pallas as pl
from jax.experimental.pallas import tpu as pltpu

LRELU_SLOPE = 0.1


def get_padding(kernel_size: int, dilation: int) -> int:
    return (kernel_size * dilation - dilation) // 2


def _resblock2_kernel(x_ref, w_ref, b_ref, o_ref, work_ref, *,
                      dilations, kernel_size, seq_len, t_tile, halo,
                      pad_max, fuse_taps, compute_dtype):
    """One (batch n, time-tile t) grid step.

    x_ref   : (1, 1, C, T_W)  input window = tile + halo on each side (input dtype)
    w_ref   : (L, C, K*C) if fuse_taps else (L, K, C, C)   bf16 conv weights (resident)
    b_ref   : (L, C, 1)       f32 conv biases
    o_ref   : (1, C, T_TILE)  output tile (lane-dense)
    work_ref: VMEM scratch holding the bf16 MXU operand:
              (K*C, T_W) if fuse_taps else (C, T_W + 2*pad_max)
    """
    C = o_ref.shape[1]
    t_out = o_ref.shape[2]
    t_w = x_ref.shape[3]
    K = kernel_size

    # Residual stream stays f32 across all layers.
    x = x_ref[0, 0].astype(jnp.float32)                          # (C, T_W)

    # Columns of this window that lie inside the true sequence [0, seq_len).  Everything
    # outside must be re-zeroed before every conv (this reproduces the conv's zero padding
    # at the real sequence boundary; interior tile boundaries keep real neighbor data).
    t_idx = pl.program_id(1)
    col = lax.broadcasted_iota(jnp.int32, (1, t_w), 1)
    g = t_idx * t_tile - halo + col                              # global column index
    in_seq = jnp.logical_and(g >= 0, g < seq_len)                # (1, T_W) bool

    if (not fuse_taps) and pad_max > 0:
        # Zero the (never otherwise written) guard columns of the padded-activation scratch
        # once per tile; the per-layer center store never touches them.
        work_ref[:, :pad_max] = jnp.zeros((C, pad_max), compute_dtype)
        work_ref[:, pad_max + t_w:] = jnp.zeros((C, pad_max), compute_dtype)

    for l, d in enumerate(dilations):                            # static unroll over layers
        p = get_padding(K, d)

        # leaky_relu + sequence-boundary mask, cast once to the bf16 MXU operand dtype.
        xt = jnp.where(in_seq, jnp.where(x >= 0.0, x, LRELU_SLOPE * x), 0.0)
        xt = xt.astype(compute_dtype)

        if fuse_taps:
            # Small C: build one (K*C, T_W) stacked-tap operand via static slice stores (no
            # concatenate) and do a single matmul with contraction K*C per layer.
            for k in range(K):
                s = k * d - p                                    # static shift, |s| <= p
                rows = slice(k * C, (k + 1) * C)
                if s >= 0:
                    work_ref[rows, 0:t_w - s] = xt[:, s:t_w]
                    if s > 0:
                        work_ref[rows, t_w - s:t_w] = jnp.zeros((C, s), compute_dtype)
                else:
                    work_ref[rows, (-s):t_w] = xt[:, 0:t_w + s]
                    work_ref[rows, 0:(-s)] = jnp.zeros((C, -s), compute_dtype)
            acc = jnp.dot(w_ref[l], work_ref[...],
                          preferred_element_type=jnp.float32)    # (C, T_W) f32
        else:
            # Large C: write xt once into the pre-zeroed padded scratch and accumulate K
            # lane-dense (C, C) @ (C, T_W) matmuls (no pad/concat copies).
            work_ref[:, pad_max:pad_max + t_w] = xt
            offs = [pad_max - p + k * d for k in range(K)]
            acc = jnp.dot(w_ref[l, 0], work_ref[:, offs[0]:offs[0] + t_w],
                          preferred_element_type=jnp.float32)
            for k in range(1, K):
                o = offs[k]
                acc = acc + jnp.dot(w_ref[l, k], work_ref[:, o:o + t_w],
                                    preferred_element_type=jnp.float32)

        # Bias + residual in f32.
        x = x + acc + b_ref[l]

    # Only the central t_out columns have the full receptive field -> lane-dense store.
    o_ref[0] = x[:, halo:halo + t_out].astype(o_ref.dtype)


def resblock2_pallas(x, weights, biases, dilations, kernel_size, *,
                     t_tile=1024, compute_dtype=jnp.bfloat16):
    """x: (N, C, T).  weights: list of effective (weight-normed) (C_out, C_in, K) conv
    weights.  biases: list of (C,)."""
    N, C, T = x.shape
    K = kernel_size
    L = len(dilations)
    pads = [get_padding(K, d) for d in dilations]
    halo = sum(pads)                  # receptive-field halo of the chained block, per side
    pad_max = max(pads)

    # ---- time tiling ---------------------------------------------------------------------
    if T <= t_tile:
        tile_t, num_t, t_padded = T, 1, T            # single full-dim tile (toy / short T)
    else:
        tile_t = max(128, (t_tile // 128) * 128)     # lane-dense, 128-aligned tiles
        num_t = pl.cdiv(T, tile_t)
        t_padded = num_t * tile_t
    t_w = tile_t + 2 * halo

    # Halo-pad the time axis and materialize the overlapping per-tile windows.
    # (Wrapper-side layout plumbing: keeps the kernel on plain blocked, auto-pipelined specs.)
    x_halo = jnp.pad(x, ((0, 0), (0, 0), (halo, (t_padded - T) + halo)))
    if num_t == 1:
        x_win = x_halo[:, None]                      # (N, 1, C, T_W) — no extra copies
    else:
        x_win = jnp.stack(
            [x_halo[:, :, i * tile_t: i * tile_t + t_w] for i in range(num_t)], axis=1
        )                                            # (N, num_t, C, T_W)

    # ---- lane-dense bf16 weights -----------------------------------------------------------
    w0 = jnp.stack(weights)                          # (L, C_out, C_in, K)  (PyTorch layout)
    fuse_taps = C < 128
    if fuse_taps:
        # (L, C_out, K*C_in): column order matches the stacked-tap operand rows [k*C + c_in].
        w_arr = jnp.transpose(w0, (0, 1, 3, 2)).reshape(L, C, K * C).astype(compute_dtype)
        w_spec = pl.BlockSpec((L, C, K * C), lambda n, t: (0, 0, 0))
        work_shape = (K * C, t_w)
    else:
        # (L, K, C_out, C_in): each per-tap (C, C) slab is contiguous and lane-dense.
        w_arr = jnp.transpose(w0, (0, 3, 1, 2)).astype(compute_dtype)
        w_spec = pl.BlockSpec((L, K, C, C), lambda n, t: (0, 0, 0, 0))
        work_shape = (C, t_w + 2 * pad_max)
    work = pltpu.VMEM(work_shape, compute_dtype)
    b_arr = jnp.stack(biases).astype(jnp.float32).reshape(L, C, 1)

    # ---- advisory cost estimate + scoped-VMEM sizing ----------------------------------------
    itemsize_x = jnp.dtype(x.dtype).itemsize
    itemsize_c = jnp.dtype(compute_dtype).itemsize
    flops = 2 * N * t_padded * L * K * C * C
    bytes_accessed = (N * C * t_padded * itemsize_x * 2          # in + out
                      + w_arr.size * itemsize_c + b_arr.size * 4)
    cost = pl.CostEstimate(flops=flops, transcendentals=0, bytes_accessed=bytes_accessed)

    # Double-buffered working-set estimate; only raise the scoped-VMEM limit when the default
    # (32 MiB) would be exceeded, so small configs keep default compiler behavior.
    vmem_est = (2 * C * t_w * itemsize_x               # input windows (double-buffered)
                + 2 * w_arr.size * itemsize_c          # weights
                + 2 * b_arr.size * 4                   # biases
                + 2 * C * tile_t * itemsize_x          # output tiles
                + int(np.prod(work_shape)) * itemsize_c)
    vmem_limit = None
    if vmem_est > (32 << 20):
        vmem_limit = min(int(vmem_est * 1.25), 120 << 20)

    kernel = functools.partial(
        _resblock2_kernel,
        dilations=tuple(dilations), kernel_size=K, seq_len=T, t_tile=tile_t,
        halo=halo, pad_max=pad_max, fuse_taps=fuse_taps, compute_dtype=compute_dtype)

    out = pl.pallas_call(
        kernel,
        out_shape=jax.ShapeDtypeStruct((N, C, t_padded), x.dtype),
        grid_spec=pltpu.PrefetchScalarGridSpec(
            num_scalar_prefetch=0,
            grid=(N, num_t),
            in_specs=[
                pl.BlockSpec((1, 1, C, t_w), lambda n, t: (n, t, 0, 0)),   # input window
                w_spec,                                                     # weights (resident)
                pl.BlockSpec((L, C, 1), lambda n, t: (0, 0, 0)),            # biases
            ],
            out_specs=pl.BlockSpec((1, C, tile_t), lambda n, t: (n, 0, t)),
            scratch_shapes=[work],
        ),
        # Batch and time tiles are fully independent -> shard across v7x's 2 TensorCores;
        # harmless on single-core v5e/v6e.
        compiler_params=pltpu.CompilerParams(
            dimension_semantics=("parallel", "parallel"),
            vmem_limit_bytes=vmem_limit),
        cost_estimate=cost,
    )(x_win, w_arr, b_arr)

    return out if t_padded == T else out[:, :, :T]


def resblock2_ref(x, weights, biases, dilations, kernel_size, conv_dtype=jnp.float32):
    """Pure-JAX reference mirroring the PyTorch forward.  conv_dtype lets us also build a
    bf16-operand / f32-accumulate reference matching the kernel's MXU precision."""
    for w, b, d in zip(weights, biases, dilations):
        p = get_padding(kernel_size, d)
        xt = jnp.where(x >= 0, x, LRELU_SLOPE * x)
        y = lax.conv_general_dilated(
            xt.astype(conv_dtype), w.astype(conv_dtype),
            window_strides=(1,),
            padding=[(p, p)],
            rhs_dilation=(d,),
            dimension_numbers=("NCH", "OIH", "NCH"),
            preferred_element_type=jnp.float32,
        )
        x = x + y + b[None, :, None]
    return x


if __name__ == "__main__":
    # Module config: ResBlock2(channels=4, kernel_size=3, dilations=[1, 3])
    N, C, T = 2, 4, 16
    K = 3
    dilations = [1, 3]
    L = len(dilations)

    key = jax.random.PRNGKey(0)
    keys = jax.random.split(key, 1 + 3 * L)
    x = jax.random.normal(keys[0], (N, C, T), jnp.float32)

    weights, biases = [], []
    for l in range(L):
        kv, kg, kb = keys[1 + 3 * l], keys[2 + 3 * l], keys[3 + 3 * l]
        # weight_norm parametrization folded on the host: w = g * v / ||v|| (per out channel)
        v = jax.random.normal(kv, (C, C, K), jnp.float32) * 0.3
        g = jnp.abs(jax.random.normal(kg, (C, 1, 1), jnp.float32)) + 0.5
        norm = jnp.sqrt(jnp.sum(v * v, axis=(1, 2), keepdims=True))
        w = g * v / norm
        bias = jax.random.normal(kb, (C,), jnp.float32) * 0.1
        weights.append(w)
        biases.append(bias)

    out = resblock2_pallas(x, weights, biases, dilations, K)
    out = jax.block_until_ready(out)

    # Tight check against a reference with the same bf16-operand / f32-accum precision.
    ref_bf16 = resblock2_ref(x, weights, biases, dilations, K, conv_dtype=jnp.bfloat16)
    np.testing.assert_allclose(np.asarray(out), np.asarray(ref_bf16), rtol=2e-3, atol=2e-3)

    # Loose sanity check against the full-f32 PyTorch-equivalent math.
    ref_f32 = resblock2_ref(x, weights, biases, dilations, K)
    np.testing.assert_allclose(np.asarray(out), np.asarray(ref_f32), rtol=5e-2, atol=5e-2)

    print("KERNEL_OK")
</pallas_src>

<mosaic_0001>
module attributes {stable_mosaic.version = 11 : i64} {
  func.func @_resblock2_kernel(%arg0: i32, %arg1: i32, %arg2: memref<1x1x4x24xf32, #tpu.memory_space<vmem>>, %arg3: memref<2x4x12xbf16, #tpu.memory_space<vmem>>, %arg4: memref<2x4x1xf32, #tpu.memory_space<vmem>>, %arg5: memref<1x4x16xf32, #tpu.memory_space<vmem>>, %arg6: memref<12x24xbf16, #tpu.memory_space<vmem>>) attributes {dimension_semantics = [#tpu.dimension_semantics<parallel>, #tpu.dimension_semantics<parallel>], iteration_bounds = array<i64: 2, 1>, scalar_prefetch = 0 : i64, scratch_operands = 1 : i64, tpu.core_type = #tpu.core_type<tc>, window_params = [{transform_indices = @transform_0, window_bounds = array<i64: 1, 1, 4, 24>}, {pipeline_mode = #tpu.pipeline_mode<synchronous>, transform_indices = @transform_1, window_bounds = array<i64: 2, 4, 12>}, {pipeline_mode = #tpu.pipeline_mode<synchronous>, transform_indices = @transform_2, window_bounds = array<i64: 2, 4, 1>}, {transform_indices = @transform_3, window_bounds = array<i64: 1, 4, 16>}]} {
    %c0 = arith.constant 0 : index
    %c0_0 = arith.constant 0 : index
    %c0_1 = arith.constant 0 : index
    %c0_2 = arith.constant 0 : index
    %0 = vector.load %arg2[%c0, %c0_0, %c0_1, %c0_2] : memref<1x1x4x24xf32, #tpu.memory_space<vmem>>, vector<1x1x4x24xf32>
    %1 = vector.shape_cast %0 : vector<1x1x4x24xf32> to vector<4x24xf32>
    %2 = tpu.iota {dimensions = array<i32: 1>} : vector<1x24xi32>
    %c16_i32 = arith.constant 16 : i32
    %3 = arith.muli %arg1, %c16_i32 : i32
    %c4_i32 = arith.constant 4 : i32
    %4 = arith.subi %3, %c4_i32 : i32
    %5 = vector.broadcast %4 : i32 to vector<1x24xi32>
    %6 = arith.addi %5, %2 : vector<1x24xi32>
    %c0_i32 = arith.constant 0 : i32
    %7 = vector.broadcast %c0_i32 : i32 to vector<1x24xi32>
    %8 = arith.cmpi sge, %6, %7 : vector<1x24xi32>
    %c16_i32_3 = arith.constant 16 : i32
    %9 = vector.broadcast %c16_i32_3 : i32 to vector<1x24xi32>
    %10 = arith.cmpi slt, %6, %9 : vector<1x24xi32>
    %11 = arith.andi %8, %10 : vector<1x24xi1>
    %cst = arith.constant 0.000000e+00 : f32
    %12 = vector.broadcast %cst : f32 to vector<4x24xf32>
    %13 = arith.cmpf oge, %1, %12 : vector<4x24xf32>
    %cst_4 = arith.constant 1.000000e-01 : f32
    %14 = vector.broadcast %cst_4 : f32 to vector<4x24xf32>
    %15 = arith.mulf %14, %1 : vector<4x24xf32>
    %16 = arith.select %13, %1, %15 : vector<4x24xi1>, vector<4x24xf32>
    %cst_5 = arith.constant 0.000000e+00 : f32
    %17 = vector.shape_cast %11 : vector<1x24xi1> to vector<1x24xi1>
    %18 = vector.broadcast %17 : vector<1x24xi1> to vector<4x24xi1>
    %19 = vector.broadcast %cst_5 : f32 to vector<4x24xf32>
    %20 = arith.select %18, %16, %19 : vector<4x24xi1>, vector<4x24xf32>
    %21 = arith.truncf %20 : vector<4x24xf32> to vector<4x24xbf16>
    %22 = vector.extract_strided_slice %21 {offsets = [0, 0], sizes = [4, 23], strides = [1, 1]} : vector<4x24xbf16> to vector<4x23xbf16>
    %c0_6 = arith.constant 0 : index
    %c1 = arith.constant 1 : index
    %23 = vector.load %arg6[%c0_6, %c1] : memref<12x24xbf16, #tpu.memory_space<vmem>>, vector<4x23xbf16>
    tpu.vector_store %arg6[%c0_6, %c1], %22 {strides = array<i32>} : memref<12x24xbf16, #tpu.memory_space<vmem>>, vector<4x23xbf16>,
    %cst_7 = arith.constant 0.000000e+00 : bf16
    %24 = vector.broadcast %cst_7 : bf16 to vector<4x1xbf16>
    %c0_8 = arith.constant 0 : index
    %c0_9 = arith.constant 0 : index
    %25 = vector.load %arg6[%c0_8, %c0_9] : memref<12x24xbf16, #tpu.memory_space<vmem>>, vector<4x1xbf16>
    tpu.vector_store %arg6[%c0_8, %c0_9], %24 {strides = array<i32>} : memref<12x24xbf16, #tpu.memory_space<vmem>>, vector<4x1xbf16>,
    %c4 = arith.constant 4 : index
    %c0_10 = arith.constant 0 : index
    %26 = vector.load %arg6[%c4, %c0_10] : memref<12x24xbf16, #tpu.memory_space<vmem>>, vector<4x24xbf16>
    tpu.vector_store %arg6[%c4, %c0_10], %21 {strides = array<i32>} : memref<12x24xbf16, #tpu.memory_space<vmem>>, vector<4x24xbf16>,
    %27 = vector.extract_strided_slice %21 {offsets = [0, 1], sizes = [4, 23], strides = [1, 1]} : vector<4x24xbf16> to vector<4x23xbf16>
    %c8 = arith.constant 8 : index
    %c0_11 = arith.constant 0 : index
    %28 = vector.load %arg6[%c8, %c0_11] : memref<12x24xbf16, #tpu.memory_space<vmem>>, vector<4x23xbf16>
    tpu.vector_store %arg6[%c8, %c0_11], %27 {strides = array<i32>} : memref<12x24xbf16, #tpu.memory_space<vmem>>, vector<4x23xbf16>,
    %cst_12 = arith.constant 0.000000e+00 : bf16
    %29 = vector.broadcast %cst_12 : bf16 to vector<4x1xbf16>
    %c8_13 = arith.constant 8 : index
    %c23 = arith.constant 23 : index
    %30 = vector.load %arg6[%c8_13, %c23] : memref<12x24xbf16, #tpu.memory_space<vmem>>, vector<4x1xbf16>
    tpu.vector_store %arg6[%c8_13, %c23], %29 {strides = array<i32>} : memref<12x24xbf16, #tpu.memory_space<vmem>>, vector<4x1xbf16>,
    %c0_14 = arith.constant 0 : index
    %c0_15 = arith.constant 0 : index
    %c0_16 = arith.constant 0 : index
    %31 = vector.load %arg3[%c0_14, %c0_15, %c0_16] : memref<2x4x12xbf16, #tpu.memory_space<vmem>>, vector<1x4x12xbf16>
    %32 = vector.shape_cast %31 : vector<1x4x12xbf16> to vector<4x12xbf16>
    %c0_17 = arith.constant 0 : index
    %c0_18 = arith.constant 0 : index
    %33 = vector.load %arg6[%c0_17, %c0_18] : memref<12x24xbf16, #tpu.memory_space<vmem>>, vector<12x24xbf16>
    %cst_19 = arith.constant dense<0.000000e+00> : vector<4x24xf32>
    %34 = tpu.matmul %32, %33, %cst_19 {dimension_numbers = #tpu.dot_dimension_numbers<[1], [0], [0], [1], [0, 0, 1, 1], [], []>} : vector<4x12xbf16>, vector<12x24xbf16>, vector<4x24xf32> -> vector<4x24xf32>
    %35 = arith.addf %1, %34 : vector<4x24xf32>
    %c0_20 = arith.constant 0 : index
    %c0_21 = arith.constant 0 : index
    %c0_22 = arith.constant 0 : index
    %36 = vector.load %arg4[%c0_20, %c0_21, %c0_22] : memref<2x4x1xf32, #tpu.memory_space<vmem>>, vector<1x4x1xf32>
    %37 = vector.shape_cast %36 : vector<1x4x1xf32> to vector<4x1xf32>
    %38 = vector.broadcast %37 : vector<4x1xf32> to vector<4x24xf32>
    %39 = arith.addf %35, %38 : vector<4x24xf32>
    %cst_23 = arith.constant 0.000000e+00 : f32
    %40 = vector.broadcast %cst_23 : f32 to vector<4x24xf32>
    %41 = arith.cmpf oge, %39, %40 : vector<4x24xf32>
    %cst_24 = arith.constant 1.000000e-01 : f32
    %42 = vector.broadcast %cst_24 : f32 to vector<4x24xf32>
    %43 = arith.mulf %42, %39 : vector<4x24xf32>
    %44 = arith.select %41, %39, %43 : vector<4x24xi1>, vector<4x24xf32>
    %cst_25 = arith.constant 0.000000e+00 : f32
    %45 = vector.shape_cast %11 : vector<1x24xi1> to vector<1x24xi1>
    %46 = vector.broadcast %45 : vector<1x24xi1> to vector<4x24xi1>
    %47 = vector.broadcast %cst_25 : f32 to vector<4x24xf32>
    %48 = arith.select %46, %44, %47 : vector<4x24xi1>, vector<4x24xf32>
    %49 = arith.truncf %48 : vector<4x24xf32> to vector<4x24xbf16>
    %50 = vector.extract_strided_slice %49 {offsets = [0, 0], sizes = [4, 21], strides = [1, 1]} : vector<4x24xbf16> to vector<4x21xbf16>
    %c0_26 = arith.constant 0 : index
    %c3 = arith.constant 3 : index
    %51 = vector.load %arg6[%c0_26, %c3] : memref<12x24xbf16, #tpu.memory_space<vmem>>, vector<4x21xbf16>
    tpu.vector_store %arg6[%c0_26, %c3], %50 {strides = array<i32>} : memref<12x24xbf16, #tpu.memory_space<vmem>>, vector<4x21xbf16>,
    %cst_27 = arith.constant 0.000000e+00 : bf16
    %52 = vector.broadcast %cst_27 : bf16 to vector<4x3xbf16>
    %c0_28 = arith.constant 0 : index
    %c0_29 = arith.constant 0 : index
    %53 = vector.load %arg6[%c0_28, %c0_29] : memref<12x24xbf16, #tpu.memory_space<vmem>>, vector<4x3xbf16>
    tpu.vector_store %arg6[%c0_28, %c0_29], %52 {strides = array<i32>} : memref<12x24xbf16, #tpu.memory_space<vmem>>, vector<4x3xbf16>,
    %c4_30 = arith.constant 4 : index
    %c0_31 = arith.constant 0 : index
    %54 = vector.load %arg6[%c4_30, %c0_31] : memref<12x24xbf16, #tpu.memory_space<vmem>>, vector<4x24xbf16>
    tpu.vector_store %arg6[%c4_30, %c0_31], %49 {strides = array<i32>} : memref<12x24xbf16, #tpu.memory_space<vmem>>, vector<4x24xbf16>,
    %55 = vector.extract_strided_slice %49 {offsets = [0, 3], sizes = [4, 21], strides = [1, 1]} : vector<4x24xbf16> to vector<4x21xbf16>
    %c8_32 = arith.constant 8 : index
    %c0_33 = arith.constant 0 : index
    %56 = vector.load %arg6[%c8_32, %c0_33] : memref<12x24xbf16, #tpu.memory_space<vmem>>, vector<4x21xbf16>
    tpu.vector_store %arg6[%c8_32, %c0_33], %55 {strides = array<i32>} : memref<12x24xbf16, #tpu.memory_space<vmem>>, vector<4x21xbf16>,
    %cst_34 = arith.constant 0.000000e+00 : bf16
    %57 = vector.broadcast %cst_34 : bf16 to vector<4x3xbf16>
    %c8_35 = arith.constant 8 : index
    %c21 = arith.constant 21 : index
    %58 = vector.load %arg6[%c8_35, %c21] : memref<12x24xbf16, #tpu.memory_space<vmem>>, vector<4x3xbf16>
    tpu.vector_store %arg6[%c8_35, %c21], %57 {strides = array<i32>} : memref<12x24xbf16, #tpu.memory_space<vmem>>, vector<4x3xbf16>,
    %c1_36 = arith.constant 1 : index
    %c0_37 = arith.constant 0 : index
    %c0_38 = arith.constant 0 : index
    %59 = vector.load %arg3[%c1_36, %c0_37, %c0_38] : memref<2x4x12xbf16, #tpu.memory_space<vmem>>, vector<1x4x12xbf16>
    %60 = vector.shape_cast %59 : vector<1x4x12xbf16> to vector<4x12xbf16>
    %c0_39 = arith.constant 0 : index
    %c0_40 = arith.constant 0 : index
    %61 = vector.load %arg6[%c0_39, %c0_40] : memref<12x24xbf16, #tpu.memory_space<vmem>>, vector<12x24xbf16>
    %cst_41 = arith.constant dense<0.000000e+00> : vector<4x24xf32>
    %62 = tpu.matmul %60, %61, %cst_41 {dimension_numbers = #tpu.dot_dimension_numbers<[1], [0], [0], [1], [0, 0, 1, 1], [], []>} : vector<4x12xbf16>, vector<12x24xbf16>, vector<4x24xf32> -> vector<4x24xf32>
    %63 = arith.addf %39, %62 : vector<4x24xf32>
    %c1_42 = arith.constant 1 : index
    %c0_43 = arith.constant 0 : index
    %c0_44 = arith.constant 0 : index
    %64 = vector.load %arg4[%c1_42, %c0_43, %c0_44] : memref<2x4x1xf32, #tpu.memory_space<vmem>>, vector<1x4x1xf32>
    %65 = vector.shape_cast %64 : vector<1x4x1xf32> to vector<4x1xf32>
    %66 = vector.broadcast %65 : vector<4x1xf32> to vector<4x24xf32>
    %67 = arith.addf %63, %66 : vector<4x24xf32>
    %68 = vector.extract_strided_slice %67 {offsets = [0, 4], sizes = [4, 16], strides = [1, 1]} : vector<4x24xf32> to vector<4x16xf32>
    %c0_45 = arith.constant 0 : index
    %c0_46 = arith.constant 0 : index
    %c0_47 = arith.constant 0 : index
    %69 = vector.load %arg5[%c0_45, %c0_46, %c0_47] : memref<1x4x16xf32, #tpu.memory_space<vmem>>, vector<1x4x16xf32>
    %70 = vector.shape_cast %69 : vector<1x4x16xf32> to vector<4x16xf32>
    %71 = vector.shape_cast %68 : vector<4x16xf32> to vector<1x4x16xf32>
    tpu.vector_store %arg5[%c0_45, %c0_46, %c0_47], %71 {strides = array<i32>} : memref<1x4x16xf32, #tpu.memory_space<vmem>>, vector<1x4x16xf32>,
    return
  }
  func.func @transform_0(%arg0: i32, %arg1: i32) -> (i32, i32, i32, i32) {
    %c0_i32 = arith.constant 0 : i32
    %c0_i32_0 = arith.constant 0 : i32
    %c0_i32_1 = arith.constant 0 : i32
    return %arg0, %arg1, %c0_i32, %c0_i32_0 : i32, i32, i32, i32
  }
  func.func @transform_1(%arg0: i32, %arg1: i32) -> (i32, i32, i32) {
    %c0_i32 = arith.constant 0 : i32
    %c0_i32_0 = arith.constant 0 : i32
    %c0_i32_1 = arith.constant 0 : i32
    %c0_i32_2 = arith.constant 0 : i32
    return %c0_i32, %c0_i32_0, %c0_i32_1 : i32, i32, i32
  }
  func.func @transform_2(%arg0: i32, %arg1: i32) -> (i32, i32, i32) {
    %c0_i32 = arith.constant 0 : i32
    %c0_i32_0 = arith.constant 0 : i32
    %c0_i32_1 = arith.constant 0 : i32
    %c0_i32_2 = arith.constant 0 : i32
    return %c0_i32, %c0_i32_0, %c0_i32_1 : i32, i32, i32
  }
  func.func @transform_3(%arg0: i32, %arg1: i32) -> (i32, i32, i32) {
    %c0_i32 = arith.constant 0 : i32
    %c0_i32_0 = arith.constant 0 : i32
    return %arg0, %c0_i32, %arg1 : i32, i32, i32
  }
}

</mosaic_0001>

<llo_original>
// kernel: tpu_custom_call.1
$region0: #{tpu_custom_call.1}
  #allocation0 [shape = 'u32[]', space=smem, size = 0x4, offset = 0x4, fixed_abs, tag = 'smem constant byte address 0x4 - core index']
  #allocation1 [shape = 'u32[72,128]{1,0:T(1,128)}', space=vmem, size = 0x9000, scoped, tag = 'internal scratch']
  #allocation2 [shape = 'bf16[12,24]{1,0:T(8,128)(2,1)}', space=vmem, size = 0x1000, scoped, tag = 'scratch operand']
  %s0 = inlined_call_operand.vmem [shape: f32[2,1,4,24], index: 0, kind: input, shape index: {}]
  %s1 = inlined_call_operand.hbm [shape: bf16[2,4,12], index: 1, kind: input, shape index: {}]
  %s2 = inlined_call_operand.vmem [shape: f32[2,4,1], index: 2, kind: input, shape index: {}]
  %s3 = inlined_call_operand.hbm [shape: f32[2,4,16], index: 3, kind: output, shape index: {}]
  %s4 = sld [smem:[#allocation0]]
  $region49: #{tpu_custom_call.1} parent=0
    _
  %s6 = ssub.s32 1, %s4
  %s7 = scalar_select 0, %s6, %s4
  $region1: #{tpu_custom_call.1} parent=0
    #allocation3 [shape = 'u8[2048]{0}', space=vmem, size = 0x800, scoped, tag = 'input window, operand 1, single buffered']
    #allocation4 [shape = 's32[2]{0}', space=sflag, size = 0x8, scoped, tag = 'scoped memory for tpu_custom_call.1']
    #allocation5 [shape = 's32[2]{0}', space=sflag, size = 0x8, scoped, tag = 'scoped memory for tpu_custom_call.1']
    #allocation6 [shape = 'u8[4096]{0}', space=vmem, size = 0x1000, scoped, tag = 'output window, operand 0']
    %8 = vsyncpa [#allocation4], 0
    %9 = vsyncpa [#allocation5], 0
    %s10 = scalar_lea.sflag [#allocation5], 1
    %11 = vsyncpa %s10, 0
    loop: start=0, step=1, limit=4
    $region2: #{tpu_custom_call.1} parent=1 // loop_pre_header
      _
    $region3: #{tpu_custom_call.1} parent=1 // loop_header
      %s13 = sphi 0, %s17
      %p14 = scmp.ge.s32.totalorder %s13, 4
      %s20 = sphi 0, %s32
      %s21 = sphi 0, %s28
      %s22 = sphi 0, %s20
      %s23 = sphi 0, %s21
      %s24 = sphi 0, %s22
      %s25 = sphi 0, %s23
      %s37 = sphi 0, %s39
      %s40 = sphi 0, %s37
      %s41 = sphi 0, %s40
      %s57 = sphi 0, %s41
      %s61 = sphi 0, %s61
      %s63 = sphi 0, %s61
      %s64 = sphi 0, %s63
      %s78 = sphi 0, %s64
      %s82 = sphi 0, %s82
      %s84 = sphi 0, %s82
      %s85 = sphi 0, %s84
      %s99 = sphi 0, %s85
      %s107 = sphi 0, %s109
      %s110 = sphi 0, %s107
      %s111 = sphi 0, %s110
      %s127 = sphi 0, %s111
    $region4: #{tpu_custom_call.1} parent=1 // loop_header_branch
      %16 = sbr.rel (%p14) target = $region8
    $region5: #{tpu_custom_call.1} parent=1 // loop_body
      %s18 = ssub.s32 %s13, 1
      %s19 = ssub.s32 %s13, 2
      %s26 = sadd.s32 1, %s21
      %p27 = scmp.ge.s32.totalorder %s26, 1
      %s28 = scalar_select %p27, 0, %s26
      %s29 = sadd.s32 1, %s20
      %s30 = scalar_select %p27, %s29, %s20
      %p31 = scmp.ge.s32.totalorder %s30, 2
      %s32 = scalar_select %p31, 0, %s30
      %s33 = ssub.s32 %s20, %s32
      %s34 = ssub.s32 %s21, %s28
      %s35 = sor.u32 %s33, %s34
      %p36 = scmp.eq.s32.totalorder %s35, 0
      %s38 = sadd.s32 %s37, 1
      %s39 = scalar_select %p36, %s37, %s38
      %p42 = pneg %p36
      %p43 = scmp.eq.s32.totalorder %s13, 1
      %p44 = por %p42, %p43
      %p45 = scmp.ne.s32.totalorder %s37, %s40
      %p46 = scmp.eq.s32.totalorder %s13, 0
      %p47 = por %p45, %p46
      %p48 = scmp.ne.s32.totalorder %s37, %s40
      %p49 = scmp.eq.s32.totalorder %s18, 1
      %p50 = por %p48, %p49
      %p51 = scmp.ne.s32.totalorder %s40, %s41
      %p52 = scmp.eq.s32.totalorder %s18, 0
      %p53 = por %p51, %p52
      %p54 = scmp.ne.s32.totalorder %s40, %s41
      %p55 = scmp.eq.s32.totalorder %s19, 1
      %p56 = por %p54, %p55
      %p58 = scmp.ne.s32.totalorder %s41, %s57
      %p59 = scmp.eq.s32.totalorder %s19, 0
      %p60 = por %p58, %p59
      %s62 = sadd.s32 %s61, 1
      %p65 = scmp.eq.s32.totalorder %s13, 1
      %p66 = scmp.ne.s32.totalorder %s61, %s63
      %p67 = scmp.eq.s32.totalorder %s13, 0
      %p68 = por %p66, %p67
      %p69 = scmp.ne.s32.totalorder %s61, %s63
      %p70 = scmp.eq.s32.totalorder %s18, 1
      %p71 = por %p69, %p70
      %p72 = scmp.ne.s32.totalorder %s63, %s64
      %p73 = scmp.eq.s32.totalorder %s18, 0
      %p74 = por %p72, %p73
      %p75 = scmp.ne.s32.totalorder %s63, %s64
      %p76 = scmp.eq.s32.totalorder %s19, 1
      %p77 = por %p75, %p76
      %p79 = scmp.ne.s32.totalorder %s64, %s78
      %p80 = scmp.eq.s32.totalorder %s19, 0
      %p81 = por %p79, %p80
      %s83 = sadd.s32 %s82, 1
      %p86 = scmp.eq.s32.totalorder %s13, 1
      %p87 = scmp.ne.s32.totalorder %s82, %s84
      %p88 = scmp.eq.s32.totalorder %s13, 0
      %p89 = por %p87, %p88
      %p90 = scmp.ne.s32.totalorder %s82, %s84
      %p91 = scmp.eq.s32.totalorder %s18, 1
      %p92 = por %p90, %p91
      %p93 = scmp.ne.s32.totalorder %s84, %s85
      %p94 = scmp.eq.s32.totalorder %s18, 0
      %p95 = por %p93, %p94
      %p96 = scmp.ne.s32.totalorder %s84, %s85
      %p97 = scmp.eq.s32.totalorder %s19, 1
      %p98 = por %p96, %p97
      %p100 = scmp.ne.s32.totalorder %s85, %s99
      %p101 = scmp.eq.s32.totalorder %s19, 0
      %p102 = por %p100, %p101
      %s103 = ssub.s32 %s20, %s32
      %s104 = ssub.s32 %s21, %s28
      %s105 = sor.u32 %s103, %s104
      %p106 = scmp.eq.s32.totalorder %s105, 0
      %s108 = sadd.s32 %s107, 1
      %s109 = scalar_select %p106, %s107, %s108
      %p112 = pneg %p106
      %p113 = scmp.eq.s32.totalorder %s13, 1
      %p114 = por %p112, %p113
      %p115 = scmp.ne.s32.totalorder %s107, %s110
      %p116 = scmp.eq.s32.totalorder %s13, 0
      %p117 = por %p115, %p116
      %p118 = scmp.ne.s32.totalorder %s107, %s110
      %p119 = scmp.eq.s32.totalorder %s18, 1
      %p120 = por %p118, %p119
      %p121 = scmp.ne.s32.totalorder %s110, %s111
      %p122 = scmp.eq.s32.totalorder %s18, 0
      %p123 = por %p121, %p122
      %p124 = scmp.ne.s32.totalorder %s110, %s111
      %p125 = scmp.eq.s32.totalorder %s19, 1
      %p126 = por %p124, %p125
      %p128 = scmp.ne.s32.totalorder %s111, %s127
      %p129 = scmp.eq.s32.totalorder %s19, 0
      %p130 = por %p128, %p129
      %p131 = scmp.le.s32.totalorder 1, %s13
      %p132 = scmp.lt.s32.totalorder %s13, 3
      %p133 = pnand %p131, %p132
      %p134 = pneg %p133
      // Predicated region
      $region9: #{tpu_custom_call.1} parent=5 // pred_check
        _
      $region10: #{tpu_custom_call.1} parent=5 // pred_check_branch
        %136 = sbr.rel (%p133) target = $region12
      $region11: #{tpu_custom_call.1} parent=5 // pred_region
        %s137 = ssub.s32 %s13, 1
        // Predicated region
        $region13: #{tpu_custom_call.1} parent=11 // pred_check
          %p138 = pneg %p74
        $region14: #{tpu_custom_call.1} parent=11 // pred_check_branch
          %140 = sbr.rel (%p138) target = $region16
        $region15: #{tpu_custom_call.1} parent=11 // pred_region
          %142 = vsyncadd [#allocation4], 0
          %s143 = sshll.u32 %s1, 4
          %s144 = int_to_ptr.hbm [resolvable:$true] %s143
          %s145 = sshll.u32 [#allocation3], 4
          %s146 = int_to_ptr.vmem [resolvable:$true] %s145
          %151 = dma.hbm_to_vmem [thread:$0]  %s144, 64, %s146, [#allocation4], 32, 32, 2
        $region16: #{tpu_custom_call.1} parent=11 // pred_fallthru
          _
        // Predicated region
        $region17: #{tpu_custom_call.1} parent=11 // pred_check
          %p152 = pneg %p95
        $region18: #{tpu_custom_call.1} parent=11 // pred_check_branch
          %154 = sbr.rel (%p152) target = $region20
        $region19: #{tpu_custom_call.1} parent=11 // pred_region
          _
        $region20: #{tpu_custom_call.1} parent=11 // pred_fallthru
          _
      $region12: #{tpu_custom_call.1} parent=5 // pred_fallthru
        _
      %p155 = scmp.lt.s32.totalorder %s13, 2
      // Predicated region
      $region21: #{tpu_custom_call.1} parent=5 // pred_check
        %p156 = pneg %p155
      $region22: #{tpu_custom_call.1} parent=5 // pred_check_branch
        %158 = sbr.rel (%p156) target = $region24
      $region23: #{tpu_custom_call.1} parent=5 // pred_region
        // Predicated region
        $region25: #{tpu_custom_call.1} parent=23 // pred_check
          %p159 = pneg %p47
        $region26: #{tpu_custom_call.1} parent=23 // pred_check_branch
          %161 = sbr.rel (%p159) target = $region28
        $region27: #{tpu_custom_call.1} parent=23 // pred_region
          %p162 = scmp.lt.s32.totalorder %s20, 1
          %s163 = scalar_select %p162, %s20, 1
          %p164 = scmp.lt.s32.totalorder %s21, 0
          %s165 = scalar_select %p164, %s21, 0
          %s166 = sadd.s32 %s165, %s163
          %s167 = smul.addr %s166, 4
          %s168 = scalar_lea.vmem %s0, %s167
        $region28: #{tpu_custom_call.1} parent=23 // pred_fallthru
          _
      $region24: #{tpu_custom_call.1} parent=5 // pred_fallthru
        _
      %p169 = scmp.le.s32.totalorder 1, %s13
      %p170 = scmp.lt.s32.totalorder %s13, 3
      %p171 = pnand %p169, %p170
      %p172 = pneg %p171
      // Predicated region
      $region29: #{tpu_custom_call.1} parent=5 // pred_check
        _
      $region30: #{tpu_custom_call.1} parent=5 // pred_check_branch
        %174 = sbr.rel (%p171) target = $region32
      $region31: #{tpu_custom_call.1} parent=5 // pred_region
        %s175 = ssub.s32 %s13, 1
        // Predicated region
        $region33: #{tpu_custom_call.1} parent=31 // pred_check
          %p176 = pneg %p74
        $region34: #{tpu_custom_call.1} parent=31 // pred_check_branch
          %178 = sbr.rel (%p176) target = $region36
        $region35: #{tpu_custom_call.1} parent=31 // pred_region
          %180 = dma.done [#allocation4], 64
        $region36: #{tpu_custom_call.1} parent=31 // pred_fallthru
          _
        %p181 = scmp.lt.s32.totalorder %s22, 1
        %s182 = scalar_select %p181, %s22, 1
        %p183 = scmp.lt.s32.totalorder %s23, 0
        %s184 = scalar_select %p183, %s23, 0
        %s185 = sadd.s32 %s184, %s182
        %s186 = smul.addr %s185, 4
        %s187 = scalar_lea.vmem %s0, %s186
        %p188 = pneg %p53
        %p189 = pneg %p50
        %p190 = pneg %p74
        %p191 = pneg %p71
        %p192 = pneg %p95
        %p193 = pneg %p92
        %p194 = pneg %p123
        %p195 = pneg %p120
        %s196 = sand.u32 %s110, 1
        %s197 = scalar_lea.sflag [#allocation5], %s196
        %s198 = sand.u32 %s110, 1
        %s199 = smul.addr %s198, 4
        %s200 = scalar_lea.vmem [#allocation6], %s199
        %p201 = scmp.lt.s32.totalorder %s22, 1
        %s202 = scalar_select %p201, %s22, 1
        %p203 = scmp.lt.s32.totalorder %s23, 0
        %s204 = scalar_select %p203, %s23, 0
        %s205 = sadd.s32 %s204, %s202
        %s206 = smul.addr %s205, 4
        %s207 = scalar_lea.vmem %s0, %s206
        %v209 = vld [vmem:[%s207] sm:$0xf]
        %v210 = vlaneseq
        %v211 = vand.u32 %v210, 127
        %s212 = smul.u32 %s23, 16
        %s213 = ssub.s32 %s212, 4
        %v214 = vstv %s213
        %v215 = vadd.s32 %v214, %v211
        %vm216 = vcmp.ge.s32.totalorder %v215, 0
        %vm217 = vcmp.lt.s32.totalorder %v215, 16
        %vm218 = vmand %vm216, %vm217
        %vm219 = vcmp.ge.f32.partialorder %v209, 0.0
        %v220 = vmul.f32 %v209, 0.1
        %v221 = vsel %vm219, %v209, %v220
        %v222 = vsel %vm218, 1, 0
        %vm223 = vcmp.eq.s32.totalorder %v222, 1
        %v224 = vsel %vm223, %v221, 0.0
        %v225 = vpack.c.bf16 %v224, %v224
        %227 = vrot.lane.b32.xlu0 %v225, 1
        %v228 = vpop.permute.xlu0 %227
        %vm230 = vcmask 189448
        %231 = vst.msk [vmem:[#allocation2] sm:$0x3] %vm230, %v228
        %vm232 = vcmask 1024
        %233 = vst.msk [vmem:[#allocation2] sm:$0x3] %vm232, 0
        %v234 = vrot.slane %v225, 6
        %vm236 = vcmask 191490
        %237 = vst.msk [vmem:[#allocation2] sm:$0xc] %vm236, %v234
        %238 = vrot.lane.b32.xlu0 %v225, 127
        %v239 = vpop.permute.xlu0 %238
        %vm241 = vcmask 181248
        %242 = vst.msk [vmem:[#allocation2 + $0x4] sm:$0x3] %vm241, %v239
        %vm243 = vcmask 189624
        %244 = vst.msk [vmem:[#allocation2 + $0x4] sm:$0x3] %vm243, 0
        %v245 = vld [vmem:[#allocation3] sm:$0x3]
        %v246 = vld [vmem:[#allocation2] sm:$0xf]
        %v247 = vld [vmem:[#allocation2 + $0x4] sm:$0x3]
        %v250 = vunpack.c.l.b16 %v246
        %v251 = vunpack.c.l.b16 %v247
        %v252 = vpack.c.b16 %v251, %v250
        %vm253 = vcmask 97280
        %v255 = vsel %vm253, %v245, 0
        %vm257 = vcmask 1045504
        %v259 = vsel %vm257, %v252, 0
        %261 = vmatpush.bf16.msra.mxu0 0
        %262 = vmatpush.bf16.msra.mxu0 0
        %263 = vmatpush.bf16.msra.mxu0 0
        %264 = vmatpush.bf16.msra.mxu0 0
        %265 = vmatpush.bf16.msra.mxu0 0
        %266 = vmatpush.bf16.msra.mxu0 0
        %267 = vmatpush.bf16.msra.mxu0 0
        %268 = vmatpush.bf16.msra.mxu0 %v259
        %269 = vmatmul.bf16.gmra.mxu0 %v255
        %v270 = vpop.f32.mrf.mxu0
        %v271 = vadd.f32 0.0, %v270
        %v272 = vpop.f32.mrf.mxu0
        %273 = vdwg.mxu0
        %v274 = vadd.f32 %v209, %v271
        %v275 = vld [vmem:[%s2] sm:$0xf]
        %277 = vset.pattern.permute.xlu0 0
        %278 = vperm.xlu0 %277, %v275
        %v279 = vpop.permute.xlu0 %278
        %v281 = vadd.f32 %v274, %v279
        %vm282 = vcmp.ge.f32.partialorder %v281, 0.0
        %v283 = vmul.f32 %v281, 0.1
        %v284 = vsel %vm282, %v281, %v283
        %v285 = vsel %vm223, %v284, 0.0
        %v286 = vpack.c.bf16 %v285, %v285
        %288 = vrot.lane.b32.xlu0 %v286, 3
        %v289 = vpop.permute.xlu0 %288
        %vm291 = vcmask 189464
        %292 = vst.msk [vmem:[#allocation2] sm:$0x3] %vm291, %v289
        %vm293 = vcmask 17408
        %294 = vst.msk [vmem:[#allocation2] sm:$0x3] %vm293, 0
        %v295 = vrot.slane %v286, 6
        %297 = vst.msk [vmem:[#allocation2] sm:$0xc] %vm236, %v295
        %298 = vrot.lane.b32.xlu0 %v286, 125
        %v299 = vpop.permute.xlu0 %298
        %vm301 = vcmask 164864
        %302 = vst.msk [vmem:[#allocation2 + $0x4] sm:$0x3] %vm301, %v299
        %vm303 = vcmask 189608
        %304 = vst.msk [vmem:[#allocation2 + $0x4] sm:$0x3] %vm303, 0
        %s305 = scalar_lea.vmem [#allocation3], 2
        %v306 = vld [vmem:[%s305] sm:$0x3]
        %v307 = vld [vmem:[#allocation2] sm:$0xf]
        %v308 = vld [vmem:[#allocation2 + $0x4] sm:$0x3]
        %v311 = vunpack.c.l.b16 %v307
        %v312 = vunpack.c.l.b16 %v308
        %v313 = vpack.c.b16 %v312, %v311
        %v315 = vsel %vm253, %v306, 0
        %v318 = vsel %vm257, %v313, 0
        %320 = vmatpush.bf16.msra.mxu0 0
        %321 = vmatpush.bf16.msra.mxu0 0
        %322 = vmatpush.bf16.msra.mxu0 0
        %323 = vmatpush.bf16.msra.mxu0 0
        %324 = vmatpush.bf16.msra.mxu0 0
        %325 = vmatpush.bf16.msra.mxu0 0
        %326 = vmatpush.bf16.msra.mxu0 0
        %327 = vmatpush.bf16.msra.mxu0 %v318
        %328 = vmatmul.bf16.gmra.mxu0 %v315
        %v329 = vpop.f32.mrf.mxu0
        %v330 = vadd.f32 0.0, %v329
        %v331 = vpop.f32.mrf.mxu0
        %332 = vdwg.mxu0
        %v333 = vadd.f32 %v281, %v330
        %s334 = scalar_lea.vmem %s2, 4
        %v335 = vld [vmem:[%s334] sm:$0xf]
        %337 = vset.pattern.permute.xlu0 0
        %338 = vperm.xlu0 %337, %v335
        %v339 = vpop.permute.xlu0 %338
        %v341 = vadd.f32 %v333, %v339
        %343 = vrot.lane.b32.xlu0 %v341, 124
        %v344 = vpop.permute.xlu0 %343
        %vm346 = vcmask 125952
        %347 = vst.msk [vmem:[%s200] sm:$0xf] %vm346, %v344
        %s348 = sand.u32 %s110, 1
        %s349 = scalar_lea.sflag [#allocation5], %s348
        %s350 = sand.u32 %s110, 1
        %s351 = smul.addr %s350, 4
        %s352 = scalar_lea.vmem [#allocation6], %s351
        // Predicated region
        $region37: #{tpu_custom_call.1} parent=31 // pred_check
          %p353 = pneg %p120
        $region38: #{tpu_custom_call.1} parent=31 // pred_check_branch
          %355 = sbr.rel (%p353) target = $region40
        $region39: #{tpu_custom_call.1} parent=31 // pred_region
          %357 = vsyncadd %s349, 0
          %s358 = sadd.s32 %s23, %s22
          %s359 = smul.addr %s358, 4
          %s360 = scalar_lea.hbm %s3, %s359
          %s362 = sshll.u32 %s352, 4
          %s363 = int_to_ptr.vmem [resolvable:$true] %s362
          %s364 = sshll.u32 %s360, 4
          %s365 = int_to_ptr.hbm [resolvable:$true] %s364
          %367 = dma.vmem_to_hbm [thread:$0]  %s363, 64, %s365, %s349
        $region40: #{tpu_custom_call.1} parent=31 // pred_fallthru
          _
      $region32: #{tpu_custom_call.1} parent=5 // pred_fallthru
        _
      %p368 = scmp.le.s32.totalorder 2, %s13
      // Predicated region
      $region41: #{tpu_custom_call.1} parent=5 // pred_check
        %p369 = pneg %p368
      $region42: #{tpu_custom_call.1} parent=5 // pred_check_branch
        %371 = sbr.rel (%p369) target = $region44
      $region43: #{tpu_custom_call.1} parent=5 // pred_region
        %s372 = ssub.s32 %s13, 2
        // Predicated region
        $region45: #{tpu_custom_call.1} parent=43 // pred_check
          %p373 = pneg %p126
        $region46: #{tpu_custom_call.1} parent=43 // pred_check_branch
          %375 = sbr.rel (%p373) target = $region48
        $region47: #{tpu_custom_call.1} parent=43 // pred_region
          %s376 = sand.u32 %s111, 1
          %s377 = scalar_lea.sflag [#allocation5], %s376
          %s378 = sand.u32 %s111, 1
          %s379 = smul.addr %s378, 4
          %s380 = scalar_lea.vmem [#allocation6], %s379
          %382 = dma.done %s377, 64
        $region48: #{tpu_custom_call.1} parent=43 // pred_fallthru
          _
      $region44: #{tpu_custom_call.1} parent=5 // pred_fallthru
        _
    $region6: #{tpu_custom_call.1} parent=1 // loop_footer
      %s17 = sadd.s32 1, %s13
    $region7: #{tpu_custom_call.1} parent=1 // loop_footer_branch
      %12 = sbr.rel target = $region3
    $region8: #{tpu_custom_call.1} parent=1 // loop_exit
      _
    %383 = vsyncpa [#allocation4], 1
    %s384 = scalar_lea.sflag [#allocation4], 1
    %385 = vsyncpa %s384, 1
    %386 = vsyncpa [#allocation5], 1
    %s387 = scalar_lea.sflag [#allocation5], 1
    %388 = vsyncpa %s387, 1

</llo_original>
